<compile_context>
chip_gen: v6e
topology: v6e:2x2x1
jax: 0.10.0
libtpu: 0.0.40
codegen_flags: <defaults>
</compile_context>

<pallas_src>
import functools

import jax
import jax.numpy as jnp
from jax.experimental import pallas as pl
from jax.experimental.pallas import tpu as pltpu


# ---------------------------------------------------------------------------
# VMEM sizing (per-generation)
# ---------------------------------------------------------------------------
def _vmem_capacity_bytes():
    try:
        info = pltpu.get_tpu_info()
        for attr in ("vmem_capacity_bytes", "vmem_size_bytes", "vmem_bytes"):
            v = getattr(info, attr, None)
            if v:
                return int(v)
    except Exception:
        pass
    # Conservative default (v7x per-TC VMEM).
    return 64 * 1024 * 1024


def _vmem_plan():
    cap = _vmem_capacity_bytes()
    # Budget for the pipeline's double-buffered blocks (2 in + 2 out).
    #   v5e/v6e (128 MiB): budget 64 MiB -> ~16 MiB input blocks, limit 96 MiB
    #   v7x     ( 64 MiB): budget 40 MiB -> ~10 MiB input blocks, limit 48 MiB
    buffer_budget = min(5 * cap // 8, 64 * 1024 * 1024)
    vmem_limit = min(3 * cap // 4, 96 * 1024 * 1024)
    return buffer_budget, vmem_limit


def _sublane_pack(dtype):
    # Sub-32-bit dtypes pack along sublanes: 8 rows/vreg for 4-byte elements,
    # 16 for 2-byte, 32 for 1-byte.
    return 32 // jnp.dtype(dtype).itemsize


def _round_up(x, m):
    return ((x + m - 1) // m) * m


# ---------------------------------------------------------------------------
# Hot path: full H*W on the lane axis, one pass.
# ---------------------------------------------------------------------------
def _he_kernel(beta_ref, x_ref, o_ref):
    x = x_ref[...]                                   # (row_tile, H*W) tile
    beta = beta_ref[0]                               # f32 scalar in SMEM
    row_max = jnp.max(x, axis=-1, keepdims=True)     # per-(b,c) spatial max
    scaled = (x.astype(jnp.float32) * beta).astype(x.dtype)
    o_ref[...] = jnp.where(x == row_max, scaled, x)


# ---------------------------------------------------------------------------
# Fallback path (huge H*W): lane-chunked two-pass (row max, then scale).
# ---------------------------------------------------------------------------
def _rowmax_kernel(x_ref, m_ref, *, hw):
    j = pl.program_id(1)

    @pl.when(j == 0)
    def _():
        m_ref[...] = jnp.full_like(m_ref, -jnp.inf)

    x = x_ref[...].astype(jnp.float32)               # (row_tile, lane_tile)
    lane_tile = x.shape[-1]
    lane_idx = j * lane_tile + jax.lax.broadcasted_iota(jnp.int32, x.shape, 1)
    x = jnp.where(lane_idx < hw, x, -jnp.inf)        # mask ragged tail lanes
    m_ref[...] = jnp.maximum(m_ref[...], jnp.max(x, axis=-1, keepdims=True))


def _scale_kernel(beta_ref, x_ref, m_ref, o_ref):
    x = x_ref[...]
    xf = x.astype(jnp.float32)
    scaled = (xf * beta_ref[0]).astype(x.dtype)
    o_ref[...] = jnp.where(xf == m_ref[...], scaled, x)


# ---------------------------------------------------------------------------
# Tile selection
# ---------------------------------------------------------------------------
def _pick_row_tile(rows, hw, itemsize, pack, budget):
    """Largest pack-aligned row tile with 4 * row_tile * hw * itemsize <= budget.
    Returns 0 if even a single pack-row tile does not fit (-> fallback path)."""
    per_row = 4 * hw * itemsize
    cap = (budget // per_row // pack) * pack
    if cap < pack:
        return 0
    return min(cap, _round_up(rows, pack))


def _pick_fallback_tiles(rows, hw, itemsize, pack, budget):
    lane_cap = budget // (4 * pack * itemsize)
    lane_tile = max((lane_cap // 128) * 128, 128)
    lane_tile = min(lane_tile, _round_up(hw, 128))
    row_cap = budget // (4 * lane_tile * itemsize)
    row_tile = max((row_cap // pack) * pack, pack)
    row_tile = min(row_tile, _round_up(rows, pack))
    return row_tile, lane_tile


# ---------------------------------------------------------------------------
# Wrapper
# ---------------------------------------------------------------------------
def he_block(x, beta, *, donate=False, _force_buffer_budget=None):
    """x: (B, C, H, W) float array. Returns an array of the same shape/dtype.

    `donate=True` asserts the caller has donated x (jax.jit donate_argnums),
    enabling in-place aliasing of the HBM buffer on the hot path."""
    B, C, H, W = x.shape
    rows = B * C
    hw = H * W
    itemsize = jnp.dtype(x.dtype).itemsize
    pack = _sublane_pack(x.dtype)

    buffer_budget, vmem_limit = _vmem_plan()
    if _force_buffer_budget is not None:
        buffer_budget = _force_buffer_budget

    x2 = x.reshape(rows, hw)
    beta_arr = jnp.asarray(beta, dtype=jnp.float32).reshape(1)

    row_tile = _pick_row_tile(rows, hw, itemsize, pack, buffer_budget)

    if row_tile >= pack:
        # ---- single-pass hot path: full H*W lane-dense blocks -------------
        out2 = pl.pallas_call(
            _he_kernel,
            out_shape=jax.ShapeDtypeStruct((rows, hw), x2.dtype),
            grid=(pl.cdiv(rows, row_tile),),
            in_specs=[
                pl.BlockSpec(memory_space=pltpu.MemorySpace.SMEM),   # beta
                pl.BlockSpec((row_tile, hw), lambda i: (i, 0)),       # x
            ],
            out_specs=pl.BlockSpec((row_tile, hw), lambda i: (i, 0)),
            input_output_aliases=({1: 0} if donate else {}),
            compiler_params=pltpu.CompilerParams(
                dimension_semantics=("parallel",),
                vmem_limit_bytes=vmem_limit,
            ),
        )(beta_arr, x2)
    else:
        # ---- fallback: H*W too large for a full-row tile -> two passes ----
        row_tile, lane_tile = _pick_fallback_tiles(
            rows, hw, itemsize, pack, buffer_budget)
        row_grid = pl.cdiv(rows, row_tile)
        lane_grid = pl.cdiv(hw, lane_tile)

        row_max = pl.pallas_call(
            functools.partial(_rowmax_kernel, hw=hw),
            out_shape=jax.ShapeDtypeStruct((rows, 1), jnp.float32),
            grid=(row_grid, lane_grid),
            in_specs=[
                pl.BlockSpec((row_tile, lane_tile), lambda i, j: (i, j)),
            ],
            out_specs=pl.BlockSpec((row_tile, 1), lambda i, j: (i, 0)),
            compiler_params=pltpu.CompilerParams(
                dimension_semantics=("parallel", "arbitrary"),
                vmem_limit_bytes=vmem_limit,
            ),
        )(x2)

        out2 = pl.pallas_call(
            _scale_kernel,
            out_shape=jax.ShapeDtypeStruct((rows, hw), x2.dtype),
            grid=(row_grid, lane_grid),
            in_specs=[
                pl.BlockSpec(memory_space=pltpu.MemorySpace.SMEM),   # beta
                pl.BlockSpec((row_tile, lane_tile), lambda i, j: (i, j)),
                pl.BlockSpec((row_tile, 1), lambda i, j: (i, 0)),
            ],
            out_specs=pl.BlockSpec((row_tile, lane_tile), lambda i, j: (i, j)),
            compiler_params=pltpu.CompilerParams(
                dimension_semantics=("parallel", "parallel"),
                vmem_limit_bytes=vmem_limit,
            ),
        )(beta_arr, x2, row_max)

    return out2.reshape(B, C, H, W)


def he_block_ref(x, beta):
    """Pure-JAX reference for correctness checking."""
    B, C, H, W = x.shape
    m = jnp.max(x.reshape(B, C, -1), axis=-1)[:, :, None, None]
    return jnp.where(x == m, x * beta, x)


if __name__ == "__main__":
    key = jax.random.PRNGKey(0)
    B, C, H, W = 2, 4, 16, 16
    beta = 2.5  # HEBlock has no learned weights; beta is a plain hyperparam

    x = jax.random.normal(key, (B, C, H, W), dtype=jnp.float32)
    ref = he_block_ref(x, beta)

    # Hot path (single-pass, full-H*W lane blocks).
    out = jax.block_until_ready(he_block(x, beta))
    assert out.shape == x.shape and out.dtype == x.dtype
    assert jnp.allclose(out, ref, atol=1e-6, rtol=1e-6)

    # Exercise the lane-chunked two-pass fallback (used when H*W is too large
    # for a full-row tile) by forcing a tiny VMEM buffer budget.
    out_fb = jax.block_until_ready(
        he_block(x, beta, _force_buffer_budget=16 * 1024))
    assert jnp.allclose(out_fb, ref, atol=1e-6, rtol=1e-6)

    print("KERNEL_OK")
</pallas_src>

<mosaic_0001>
module attributes {stable_mosaic.version = 11 : i64} {
  func.func @_he_kernel(%arg0: i32, %arg1: memref<1xf32, #tpu.memory_space<smem>>, %arg2: memref<8x256xf32, #tpu.memory_space<vmem>>, %arg3: memref<8x256xf32, #tpu.memory_space<vmem>>) attributes {dimension_semantics = [#tpu.dimension_semantics<parallel>], iteration_bounds = array<i64: 1>, scalar_prefetch = 0 : i64, scratch_operands = 0 : i64, tpu.core_type = #tpu.core_type<tc>, window_params = [{transform_indices = @transform_0, window_bounds = array<i64: 1>}, {transform_indices = @transform_1, window_bounds = array<i64: 8, 256>}, {transform_indices = @transform_2, window_bounds = array<i64: 8, 256>}]} {
    %c0 = arith.constant 0 : index
    %c0_0 = arith.constant 0 : index
    %0 = vector.load %arg2[%c0, %c0_0] : memref<8x256xf32, #tpu.memory_space<vmem>>, vector<8x256xf32>
    %c0_1 = arith.constant 0 : index
    %1 = memref.load %arg1[%c0_1] : memref<1xf32, #tpu.memory_space<smem>>
    %cst = arith.constant dense<0xFF800000> : vector<8xf32>
    %2 = vector.multi_reduction <maximumf>, %0, %cst [1] : vector<8x256xf32> to vector<8xf32>
    %3 = vector.shape_cast %2 : vector<8xf32> to vector<8x1xf32>
    %4 = vector.broadcast %1 : f32 to vector<8x256xf32>
    %5 = arith.mulf %0, %4 : vector<8x256xf32>
    %6 = vector.broadcast %3 : vector<8x1xf32> to vector<8x256xf32>
    %7 = arith.cmpf oeq, %0, %6 : vector<8x256xf32>
    %8 = arith.select %7, %5, %0 : vector<8x256xi1>, vector<8x256xf32>
    %c0_2 = arith.constant 0 : index
    %c0_3 = arith.constant 0 : index
    %9 = vector.load %arg3[%c0_2, %c0_3] : memref<8x256xf32, #tpu.memory_space<vmem>>, vector<8x256xf32>
    tpu.vector_store %arg3[%c0_2, %c0_3], %8 {strides = array<i32>} : memref<8x256xf32, #tpu.memory_space<vmem>>, vector<8x256xf32>,
    return
  }
  func.func @transform_0(%arg0: i32) -> i32 {
    %c0_i32 = arith.constant 0 : i32
    %c0_i32_0 = arith.constant 0 : i32
    return %c0_i32 : i32
  }
  func.func @transform_1(%arg0: i32) -> (i32, i32) {
    %c0_i32 = arith.constant 0 : i32
    %c0_i32_0 = arith.constant 0 : i32
    return %arg0, %c0_i32 : i32, i32
  }
  func.func @transform_2(%arg0: i32) -> (i32, i32) {
    %c0_i32 = arith.constant 0 : i32
    %c0_i32_0 = arith.constant 0 : i32
    return %arg0, %c0_i32 : i32, i32
  }
}

</mosaic_0001>

<llo_original>
// kernel: tpu_custom_call.1
$region0: #{tpu_custom_call.1}
  #allocation0 [shape = 'u32[]', space=smem, size = 0x4, offset = 0x4, fixed_abs, tag = 'smem constant byte address 0x4 - core index']
  #allocation1 [shape = 'u32[144,128]{1,0:T(1,128)}', space=vmem, size = 0x12000, scoped, tag = 'internal scratch']
  #allocation2 [shape = 'f32[1]{0:T(128)S(6)}', space=smem, size = 0x200, scoped, tag = 'scoped memory for tpu_custom_call.1']
  %s0 = inlined_call_operand.<no memory space> [shape: f32[1], index: 0, kind: input, shape index: {}]
  %s1 = inlined_call_operand.hbm [shape: f32[8,256], index: 1, kind: input, shape index: {}]
  %s2 = inlined_call_operand.hbm [shape: f32[8,256], index: 2, kind: output, shape index: {}]
  %s3 = sld [smem:[#allocation0]]
  $region22: #{tpu_custom_call.1} parent=0
    _
  %s5 = ssub.s32 1, %s3
  %s6 = scalar_select 0, %s5, %s3
  %7 = sst [smem:[#allocation2]] %s0
  $region1: #{tpu_custom_call.1} parent=0
    #allocation3 [shape = 'u8[8192]{0}', space=vmem, size = 0x2000, scoped, tag = 'input window, operand 1, single buffered']
    #allocation4 [shape = 's32[1]{0}', space=sflag, size = 0x4, scoped, tag = 'scoped memory for tpu_custom_call.1']
    #allocation5 [shape = 's32[1]{0}', space=sflag, size = 0x4, scoped, tag = 'scoped memory for tpu_custom_call.1']
    #allocation6 [shape = 'u8[8192]{0}', space=vmem, size = 0x2000, scoped, tag = 'output window, operand 0, single buffered']
    %8 = vsyncpa [#allocation4], 0
    %9 = vsyncpa [#allocation5], 0
    // Predicated region
    $region2: #{tpu_custom_call.1} parent=1 // pred_check
      _
    $region3: #{tpu_custom_call.1} parent=1 // pred_check_branch
      %11 = sbr.rel (0) target = $region5
    $region4: #{tpu_custom_call.1} parent=1 // pred_region
      _
    $region5: #{tpu_custom_call.1} parent=1 // pred_fallthru
      _
    // Predicated region
    $region6: #{tpu_custom_call.1} parent=1 // pred_check
      _
    $region7: #{tpu_custom_call.1} parent=1 // pred_check_branch
      %13 = sbr.rel (0) target = $region9
    $region8: #{tpu_custom_call.1} parent=1 // pred_region
      %s15 = ssub.s32 256, 256
      %16 = vsyncadd [#allocation4], %s15
      %s18 = sshll.u32 [#allocation3], 4
      %s19 = int_to_ptr.vmem [resolvable:$true] %s18
      %21 = dma.hbm_to_vmem [thread:$0]  %s1, 256, %s19, [#allocation4]
    $region9: #{tpu_custom_call.1} parent=1 // pred_fallthru
      _
    // Predicated region
    $region10: #{tpu_custom_call.1} parent=1 // pred_check
      _
    $region11: #{tpu_custom_call.1} parent=1 // pred_check_branch
      %23 = sbr.rel (0) target = $region13
    $region12: #{tpu_custom_call.1} parent=1 // pred_region
      %24 = dma.done [#allocation4], 256
    $region13: #{tpu_custom_call.1} parent=1 // pred_fallthru
      _
    %v25 = vld [vmem:[#allocation3] sm:$0xff]
    %v26 = vld [vmem:[#allocation3 + $0x8] sm:$0xff]
    %s27 = sld [smem:[#allocation2]]
    %v28 = vmax.f32 %v25, %v26
    %29 = vmax.xlane.f32.xlu0 %v28
    %v30 = vpop.xlane.xlu0 %29
    %v31 = vstv %s27
    %v32 = vmul.f32 %v25, %v31
    %v33 = vmul.f32 %v26, %v31
    %vm34 = vcmp.eq.f32.partialorder %v25, %v30
    %vm35 = vcmp.eq.f32.partialorder %v26, %v30
    %v36 = vsel %vm34, %v32, %v25
    %v37 = vsel %vm35, %v33, %v26
    %38 = vst [vmem:[#allocation6] sm:$0xff] %v36
    %39 = vst [vmem:[#allocation6 + $0x8] sm:$0xff] %v37
    // Predicated region
    $region14: #{tpu_custom_call.1} parent=1 // pred_check
      _
    $region15: #{tpu_custom_call.1} parent=1 // pred_check_branch
      %41 = sbr.rel (0) target = $region17
    $region16: #{tpu_custom_call.1} parent=1 // pred_region
      %s43 = ssub.s32 256, 256
      %44 = vsyncadd [#allocation5], %s43
      %s46 = sshll.u32 [#allocation6], 4
      %s47 = int_to_ptr.vmem [resolvable:$true] %s46
      %49 = dma.vmem_to_hbm [thread:$0]  %s47, 256, %s2, [#allocation5]
    $region17: #{tpu_custom_call.1} parent=1 // pred_fallthru
      _
    // Predicated region
    $region18: #{tpu_custom_call.1} parent=1 // pred_check
      _
    $region19: #{tpu_custom_call.1} parent=1 // pred_check_branch
      %51 = sbr.rel (0) target = $region21
    $region20: #{tpu_custom_call.1} parent=1 // pred_region
      %52 = dma.done [#allocation5], 256
    $region21: #{tpu_custom_call.1} parent=1 // pred_fallthru
      _
    %53 = vsyncpa [#allocation4], 1
    %54 = vsyncpa [#allocation5], 1

</llo_original>
